<compile_context>
chip_gen: v7x
topology: tpu7x:2x2x1
jax: 0.10.0
libtpu: 0.0.40
codegen_flags: <defaults>
</compile_context>

<pallas_src>
import functools

import jax
import jax.numpy as jnp
from jax import lax
from jax.experimental import pallas as pl
from jax.experimental.pallas import tpu as pltpu


# --------------------------------------------------------------------------- #
# Planning helpers
# --------------------------------------------------------------------------- #

_MAX_HW_CHUNKS = 128  # cap on 128-lane chunks per block (bounds in-kernel unroll)


def _cdiv(a, b):
    return -(-a // b)


def _round_up(x, m):
    return ((x + m - 1) // m) * m


def _sublane(itemsize):
    # Native sublane tiling: 8 rows for 4-byte, 16 for 2-byte, 32 for 1-byte.
    return 8 * (4 // int(itemsize))


def _device_config(vmem_budget_override=None):
    """Per-generation VMEM budget, scoped-VMEM limit and pipeline depth."""
    kind = ""
    try:
        kind = jax.devices()[0].device_kind.lower()
    except Exception:
        pass
    if "v7" in kind:
        # 64 MiB physical VMEM per TC, 2 TCs/chip: keep totals <= ~48 MiB and
        # make sure the "parallel" row axis gets >= 2 steps (megacore).
        cfg = dict(vmem_budget=36 << 20, vmem_limit=48 << 20,
                   buffers=3, min_row_splits=2)
    elif "v6" in kind:
        # 128 MiB physical, 32 MiB scoped default -> raise the limit so this
        # mem-bound stream can use large blocks (~85% of HBM roofline).
        cfg = dict(vmem_budget=40 << 20, vmem_limit=80 << 20,
                   buffers=2, min_row_splits=1)
    elif "v5" in kind:
        cfg = dict(vmem_budget=28 << 20, vmem_limit=48 << 20,
                   buffers=2, min_row_splits=1)
    else:
        # Unknown generation: stay under the most conservative scoped default.
        cfg = dict(vmem_budget=10 << 20, vmem_limit=None,
                   buffers=2, min_row_splits=1)
    if vmem_budget_override is not None:
        cfg = dict(cfg, vmem_budget=int(vmem_budget_override))
    return cfg


def _compiler_params(cfg):
    kwargs = dict(dimension_semantics=("parallel", "arbitrary"))
    if cfg["vmem_limit"] is not None:
        kwargs["vmem_limit_bytes"] = int(cfg["vmem_limit"])
    return pltpu.CompilerParams(**kwargs)


def _make_spec(block_shape, index_map, buffers):
    """BlockSpec with optional deeper multi-buffering (v7x)."""
    if buffers != 2:
        try:
            return pl.BlockSpec(block_shape, index_map,
                                pipeline_mode=pl.Buffered(buffers))
        except (TypeError, AttributeError):  # older jax without pipeline_mode
            pass
    return pl.BlockSpec(block_shape, index_map)


def _pick_hw_tile(hw, max_chunks):
    """Largest hw tile (multiple of 128, or full hw) given a 128-lane-chunk budget."""
    max_chunks = max(min(max_chunks, _MAX_HW_CHUNKS), 1)
    hw_chunks = _cdiv(hw, 128)
    if hw_chunks <= max_chunks:
        return hw
    for c in range(max_chunks, 0, -1):        # prefer a divisor: no tail masking
        if hw % (c * 128) == 0:
            return c * 128
    return max_chunks * 128                    # cdiv grid + in-kernel tail mask


def _plan_flat(rows, hw, e_f, e_m, cfg):
    """Tiles for the flattened (rows=N*M, hw) layout: (tile_r, tile_hw, lanes)."""
    sub = max(_sublane(e_f), _sublane(e_m))
    buffers, budget = cfg["buffers"], cfg["vmem_budget"]

    if rows <= sub:
        tile_r = rows
    else:
        # Rows affordable with a full-hw block: lets small spatial extents use
        # taller row tiles (fewer grid steps); clamped to [512, 4096].
        per_row_full = buffers * _round_up(hw, 128) * (e_f + e_m) + 128 * 4
        row_cap = max((budget // per_row_full) // sub * sub, sub)
        row_cap = min(max(row_cap, 512), 4096)
        tile_r = min(_round_up(rows, sub), row_cap)
        if cfg["min_row_splits"] > 1 and rows >= 2 * sub:
            tile_r = min(tile_r,
                         _round_up(_cdiv(rows, cfg["min_row_splits"]), sub))
        tile_r = min(tile_r, rows)

    pr = _round_up(tile_r, sub)                          # sublane-padded rows
    per_chunk = buffers * 128 * pr * (e_f + e_m)         # bytes / 128-lane chunk
    acc_bytes = _round_up(tile_r, 8) * 128 * 4
    tile_hw = _pick_hw_tile(hw, (budget - acc_bytes) // per_chunk)
    lanes = 128 if tile_hw % 128 == 0 else 1
    return tile_r, tile_hw, lanes


def _plan_bcast(N, M, hw, f_shape, m_shape, e_f, e_m, out_itemsize, cfg):
    """Tiles for the broadcasting (N|1, M|1, hw) layout: (tile_n, tile_hw, lanes)."""
    sub_f, sub_m = _sublane(e_f), _sublane(e_m)
    sub_out = _sublane(out_itemsize)
    buffers, budget = cfg["buffers"], cfg["vmem_budget"]

    # Sublane padding of the M (second-to-last) block dim, per operand dtype.
    pm_f = _round_up(f_shape[1], sub_f)
    pm_m = _round_up(m_shape[1], sub_m)

    cands = [d for d in range(sub_out, N + 1, sub_out) if N % d == 0]
    if N not in cands:
        cands.append(N)
    cands.sort()
    if cfg["min_row_splits"] > 1 and len(cands) > 1:
        cands = [d for d in cands if d < N] or cands     # >= 2 row tiles on v7x

    def block_set_bytes(tn, hw_cols):
        bf = (tn if f_shape[0] == N else 1) * pm_f * hw_cols * e_f
        bm = (tn if m_shape[0] == N else 1) * pm_m * hw_cols * e_m
        return bf + bm

    def acc_bytes(tn):
        return tn * _round_up(M, 8) * 128 * 4

    # Prefer full-hw blocks: an operand that broadcasts over N then has a
    # constant block index and is DMA'd from HBM exactly once (VMEM-resident)
    # instead of being re-streamed once per n-tile.
    if _cdiv(hw, 128) <= _MAX_HW_CHUNKS:
        hw_cols = _round_up(hw, 128)
        for tn in sorted(cands, reverse=True):
            if buffers * block_set_bytes(tn, hw_cols) + acc_bytes(tn) <= budget:
                return tn, hw, (128 if hw % 128 == 0 else 1)

    # Otherwise tile hw; a broadcast-over-N operand is re-fetched once per
    # n-tile (extra HBM traffic bounded by ~1/tile_n of its own size).
    tn = cands[0]
    per_chunk = buffers * block_set_bytes(tn, 128)
    tile_hw = _pick_hw_tile(hw, (budget - acc_bytes(tn)) // per_chunk)
    lanes = 128 if tile_hw % 128 == 0 else 1
    return tn, tile_hw, lanes


# --------------------------------------------------------------------------- #
# Kernel
# --------------------------------------------------------------------------- #

def _pool_kernel(feat_ref, mask_ref, out_ref, acc_ref, *, inv_hw, hw):
    """One (row-tile, hw-tile) grid step.

    feat_ref / mask_ref : input blocks, last dim = tile_hw (or 1 for a
                          spatially-broadcast operand); leading dims may be 1
                          for operands broadcast over N / M.
    out_ref             : output block, written at the last hw step.
    acc_ref             : f32 accumulator scratch; last dim is either 128
                          (lane-partial sums) or 1 (direct per-step reduce).
    """
    k = pl.program_id(1)

    @pl.when(k == 0)
    def _init():
        acc_ref[...] = jnp.zeros_like(acc_ref)

    # bf16 stays bf16 in HBM (half the bandwidth); upcast only in VMEM.
    prod = feat_ref[...].astype(jnp.float32) * mask_ref[...].astype(jnp.float32)
    tile_hw = prod.shape[-1]

    if hw % tile_hw != 0:
        # cdiv grid over hw: zero the padded tail of the last block.
        col = lax.broadcasted_iota(jnp.int32, prod.shape, prod.ndim - 1)
        prod = jnp.where(col < hw - k * tile_hw, prod, 0.0)

    lanes = acc_ref.shape[-1]
    if lanes == 1:
        partial = jnp.sum(prod, axis=-1, keepdims=True)
    else:
        # Lane-partial accumulation: only lane-aligned VALU adds per step; the
        # single cross-lane (XLU) reduce happens once, in the finalize step.
        partial = prod[..., :lanes]
        for j in range(1, tile_hw // lanes):
            partial = partial + prod[..., j * lanes:(j + 1) * lanes]
    acc_ref[...] += partial

    @pl.when(k == pl.num_programs(1) - 1)
    def _finalize():
        keep = len(out_ref.shape) == len(acc_ref.shape)
        total = jnp.sum(acc_ref[...], axis=-1, keepdims=keep)
        out_ref[...] = (total * inv_hw).astype(out_ref.dtype)


# --------------------------------------------------------------------------- #
# Wrapper
# --------------------------------------------------------------------------- #

def global_mask_weighted_pooling_head(features, part_masks, *,
                                      vmem_budget_bytes=None):
    """features, part_masks: 4-D, broadcastable to (N, M, H, W) -> (N, M, 1)."""
    if features.ndim != 4 or part_masks.ndim != 4:
        raise ValueError("expected 4-D (N, M, H, W) inputs")

    N, M, H, W = jnp.broadcast_shapes(features.shape, part_masks.shape)
    hw = H * W
    out_dtype = jnp.result_type(features.dtype, part_masks.dtype)
    cfg = _device_config(vmem_budget_bytes)
    e_f = features.dtype.itemsize
    e_m = part_masks.dtype.itemsize

    kernel = functools.partial(_pool_kernel, inv_hw=float(1.0 / hw), hw=hw)
    cost = pl.CostEstimate(
        flops=2 * N * M * hw,
        transcendentals=0,
        bytes_accessed=(features.size * e_f + part_masks.size * e_m
                        + N * M * jnp.dtype(out_dtype).itemsize))

    full = (N, M, H, W)
    if features.shape == full and part_masks.shape == full:
        # ----- common case: no broadcasting -> flatten to (N*M, H*W) --------
        rows = N * M
        tile_r, tile_hw, lanes = _plan_flat(rows, hw, e_f, e_m, cfg)
        grid = (_cdiv(rows, tile_r), _cdiv(hw, tile_hw))
        buffers = cfg["buffers"] if grid[0] * grid[1] >= cfg["buffers"] else 2

        in_specs = [_make_spec((tile_r, tile_hw), lambda i, k: (i, k), buffers)
                    for _ in range(2)]
        out = pl.pallas_call(
            kernel,
            out_shape=jax.ShapeDtypeStruct((rows, 1), out_dtype),
            grid_spec=pltpu.PrefetchScalarGridSpec(
                num_scalar_prefetch=0,
                grid=grid,
                in_specs=in_specs,
                out_specs=pl.BlockSpec((tile_r, 1), lambda i, k: (i, 0)),
                scratch_shapes=[pltpu.VMEM((tile_r, lanes), jnp.float32)],
            ),
            compiler_params=_compiler_params(cfg),
            cost_estimate=cost,
        )(features.reshape(rows, hw), part_masks.reshape(rows, hw))
        return out.reshape(N, M, 1)

    # ----- broadcasting over N and/or M: keep (N|1, M|1, hw) operands -------
    def _to_3d(x):
        if x.shape[2:] != (H, W) and x.shape[2:] != (1, 1):
            # TODO(synk): mixed spatial broadcast (e.g. (..., H, 1)) could use a
            # 4-D BlockSpec with the size-1 dim pinned instead of materializing.
            x = jnp.broadcast_to(x, x.shape[:2] + (H, W))
        return x.reshape(x.shape[0], x.shape[1], x.shape[2] * x.shape[3])

    feat3 = _to_3d(features)
    mask3 = _to_3d(part_masks)

    tile_n, tile_hw, lanes = _plan_bcast(
        N, M, hw, feat3.shape, mask3.shape, e_f, e_m,
        jnp.dtype(out_dtype).itemsize, cfg)
    grid = (_cdiv(N, tile_n), _cdiv(hw, tile_hw))
    multi_hw = grid[1] > 1
    buffers = cfg["buffers"] if grid[0] * grid[1] >= cfg["buffers"] else 2

    def _spec3(x3):
        over_n = x3.shape[0] == N                  # varies with the row tile i
        over_hw = x3.shape[2] != 1 and multi_hw    # varies with the hw tile k
        bn = tile_n if x3.shape[0] == N else 1
        bm = x3.shape[1]                           # M or 1 (full dim -> legal)
        bh = tile_hw if x3.shape[2] != 1 else 1

        def index_map(i, k, _n=over_n, _h=over_hw):
            # Constant block index for broadcast dims -> block stays VMEM
            # resident instead of being re-streamed from HBM.
            return (i if _n else 0, 0, k if _h else 0)

        # Deeper buffering only helps blocks whose index actually changes.
        b = buffers if ((over_n and grid[0] > 1) or over_hw) else 2
        return _make_spec((bn, bm, bh), index_map, b)

    out = pl.pallas_call(
        kernel,
        out_shape=jax.ShapeDtypeStruct((N, M), out_dtype),
        grid_spec=pltpu.PrefetchScalarGridSpec(
            num_scalar_prefetch=0,
            grid=grid,
            in_specs=[_spec3(feat3), _spec3(mask3)],
            out_specs=pl.BlockSpec((tile_n, M), lambda i, k: (i, 0)),
            scratch_shapes=[pltpu.VMEM((tile_n, M, lanes), jnp.float32)],
        ),
        compiler_params=_compiler_params(cfg),
        cost_estimate=cost,
    )(feat3, mask3)
    return out.reshape(N, M, 1)


# --------------------------------------------------------------------------- #
# Self-test
# --------------------------------------------------------------------------- #

if __name__ == "__main__":
    root = jax.random.PRNGKey(0)
    keys = jax.random.split(root, 10)

    def reference(f, m):
        p = f.astype(jnp.float32) * m.astype(jnp.float32)
        r = jnp.mean(p, axis=(2, 3))
        return r.reshape(r.shape[0], r.shape[1], 1)

    # 1) spec-sized, no broadcasting (flattened 2-D path, single grid step).
    f1 = jax.random.normal(keys[0], (2, 4, 16, 16), dtype=jnp.float32)
    m1 = jax.nn.softmax(
        jax.random.normal(keys[1], (2, 4, 16, 16), dtype=jnp.float32), axis=1)
    o1 = jax.block_until_ready(global_mask_weighted_pooling_head(f1, m1))
    assert o1.shape == (2, 4, 1) and o1.dtype == jnp.float32
    assert jnp.allclose(o1, reference(f1, m1), atol=1e-5, rtol=1e-5)

    # 2) no broadcasting, mixed dtypes (bf16 features, f32 masks); the small
    #    planning budget forces multiple row tiles x hw tiles with in-kernel
    #    tail masking (hw = 400 is not a multiple of 128).
    f2 = jax.random.normal(keys[2], (32, 32, 20, 20), dtype=jnp.bfloat16)
    m2 = jax.nn.softmax(
        jax.random.normal(keys[3], (32, 32, 20, 20), dtype=jnp.float32), axis=1)
    o2 = jax.block_until_ready(
        global_mask_weighted_pooling_head(f2, m2, vmem_budget_bytes=256 * 1024))
    assert o2.shape == (32, 32, 1) and o2.dtype == jnp.float32
    assert jnp.allclose(o2, reference(f2, m2), atol=1e-3, rtol=1e-2)

    # 3) mask broadcast over N (3-D path, full-hw blocks, one grid step).
    f3 = jax.random.normal(keys[4], (4, 4, 16, 16), dtype=jnp.float32)
    m3 = jax.nn.softmax(
        jax.random.normal(keys[5], (1, 4, 16, 16), dtype=jnp.float32), axis=1)
    o3 = jax.block_until_ready(global_mask_weighted_pooling_head(f3, m3))
    assert o3.shape == (4, 4, 1)
    assert jnp.allclose(o3, reference(f3, m3), atol=1e-5, rtol=1e-5)

    # 4) mask broadcast over N, small budget -> multiple n-tiles with the mask
    #    kept VMEM-resident (constant block index) across the whole grid.
    f4 = jax.random.normal(keys[6], (16, 8, 16, 16), dtype=jnp.float32)
    m4 = jax.nn.softmax(
        jax.random.normal(keys[7], (1, 8, 16, 16), dtype=jnp.float32), axis=1)
    o4 = jax.block_until_ready(
        global_mask_weighted_pooling_head(f4, m4, vmem_budget_bytes=200 * 1024))
    assert o4.shape == (16, 8, 1)
    assert jnp.allclose(o4, reference(f4, m4), atol=1e-5, rtol=1e-5)

    # 5) mask broadcast over N, tiny budget -> hw tiling on the 3-D path with a
    #    non-128-multiple hw (24*24 = 576) and in-kernel tail masking.
    f5 = jax.random.normal(keys[8], (16, 4, 24, 24), dtype=jnp.float32)
    m5 = jax.nn.softmax(
        jax.random.normal(keys[9], (1, 4, 24, 24), dtype=jnp.float32), axis=1)
    o5 = jax.block_until_ready(
        global_mask_weighted_pooling_head(f5, m5, vmem_budget_bytes=64 * 1024))
    assert o5.shape == (16, 4, 1)
    assert jnp.allclose(o5, reference(f5, m5), atol=1e-5, rtol=1e-5)

    print("KERNEL_OK")
</pallas_src>

<mosaic_0001>
module attributes {stable_mosaic.version = 11 : i64} {
  func.func @_pool_kernel(%arg0: i32, %arg1: i32, %arg2: memref<8x256xf32, #tpu.memory_space<vmem>>, %arg3: memref<8x256xf32, #tpu.memory_space<vmem>>, %arg4: memref<8x1xf32, #tpu.memory_space<vmem>>, %arg5: memref<8x128xf32, #tpu.memory_space<vmem>>) attributes {dimension_semantics = [#tpu.dimension_semantics<parallel>, #tpu.dimension_semantics<arbitrary>], iteration_bounds = array<i64: 1, 1>, scalar_prefetch = 0 : i64, scratch_operands = 1 : i64, tpu.core_type = #tpu.core_type<tc>, window_params = [{transform_indices = @transform_0, window_bounds = array<i64: 8, 256>}, {transform_indices = @transform_1, window_bounds = array<i64: 8, 256>}, {transform_indices = @transform_2, window_bounds = array<i64: 8, 1>}]} {
    %c0_i32 = arith.constant 0 : i32
    %0 = arith.cmpi eq, %arg1, %c0_i32 : i32
    %1 = arith.extui %0 : i1 to i32
    %c0_i32_0 = arith.constant 0 : i32
    %2 = arith.cmpi ne, %1, %c0_i32_0 : i32
    scf.if %2 {
      %cst = arith.constant 0.000000e+00 : f32
      %15 = vector.broadcast %cst : f32 to vector<8x128xf32>
      %c0_10 = arith.constant 0 : index
      %c0_11 = arith.constant 0 : index
      %16 = vector.load %arg5[%c0_10, %c0_11] : memref<8x128xf32, #tpu.memory_space<vmem>>, vector<8x128xf32>
      tpu.vector_store %arg5[%c0_10, %c0_11], %15 {strides = array<i32>} : memref<8x128xf32, #tpu.memory_space<vmem>>, vector<8x128xf32>,
    } else {
    }
    %c0 = arith.constant 0 : index
    %c0_1 = arith.constant 0 : index
    %3 = vector.load %arg2[%c0, %c0_1] : memref<8x256xf32, #tpu.memory_space<vmem>>, vector<8x256xf32>
    %c0_2 = arith.constant 0 : index
    %c0_3 = arith.constant 0 : index
    %4 = vector.load %arg3[%c0_2, %c0_3] : memref<8x256xf32, #tpu.memory_space<vmem>>, vector<8x256xf32>
    %5 = arith.mulf %3, %4 : vector<8x256xf32>
    %6 = vector.extract_strided_slice %5 {offsets = [0, 0], sizes = [8, 128], strides = [1, 1]} : vector<8x256xf32> to vector<8x128xf32>
    %7 = vector.extract_strided_slice %5 {offsets = [0, 128], sizes = [8, 128], strides = [1, 1]} : vector<8x256xf32> to vector<8x128xf32>
    %8 = arith.addf %6, %7 : vector<8x128xf32>
    %c0_4 = arith.constant 0 : index
    %c0_5 = arith.constant 0 : index
    %9 = vector.load %arg5[%c0_4, %c0_5] : memref<8x128xf32, #tpu.memory_space<vmem>>, vector<8x128xf32>
    %10 = arith.addf %9, %8 : vector<8x128xf32>
    %c0_6 = arith.constant 0 : index
    %c0_7 = arith.constant 0 : index
    %11 = vector.load %arg5[%c0_6, %c0_7] : memref<8x128xf32, #tpu.memory_space<vmem>>, vector<8x128xf32>
    tpu.vector_store %arg5[%c0_6, %c0_7], %10 {strides = array<i32>} : memref<8x128xf32, #tpu.memory_space<vmem>>, vector<8x128xf32>,
    %c0_i32_8 = arith.constant 0 : i32
    %12 = arith.cmpi eq, %arg1, %c0_i32_8 : i32
    %13 = arith.extui %12 : i1 to i32
    %c0_i32_9 = arith.constant 0 : i32
    %14 = arith.cmpi ne, %13, %c0_i32_9 : i32
    scf.if %14 {
      %c0_10 = arith.constant 0 : index
      %c0_11 = arith.constant 0 : index
      %15 = vector.load %arg5[%c0_10, %c0_11] : memref<8x128xf32, #tpu.memory_space<vmem>>, vector<8x128xf32>
      %cst = arith.constant dense<0.000000e+00> : vector<8xf32>
      %16 = vector.multi_reduction <add>, %15, %cst [1] : vector<8x128xf32> to vector<8xf32>
      %17 = vector.shape_cast %16 : vector<8xf32> to vector<8x1xf32>
      %cst_12 = arith.constant 3.906250e-03 : f32
      %18 = vector.broadcast %cst_12 : f32 to vector<8x1xf32>
      %19 = arith.mulf %17, %18 : vector<8x1xf32>
      %c0_13 = arith.constant 0 : index
      %c0_14 = arith.constant 0 : index
      %20 = vector.load %arg4[%c0_13, %c0_14] : memref<8x1xf32, #tpu.memory_space<vmem>>, vector<8x1xf32>
      tpu.vector_store %arg4[%c0_13, %c0_14], %19 {strides = array<i32>} : memref<8x1xf32, #tpu.memory_space<vmem>>, vector<8x1xf32>,
    } else {
    }
    return
  }
  func.func @transform_0(%arg0: i32, %arg1: i32) -> (i32, i32) {
    %c0_i32 = arith.constant 0 : i32
    return %arg0, %arg1 : i32, i32
  }
  func.func @transform_1(%arg0: i32, %arg1: i32) -> (i32, i32) {
    %c0_i32 = arith.constant 0 : i32
    return %arg0, %arg1 : i32, i32
  }
  func.func @transform_2(%arg0: i32, %arg1: i32) -> (i32, i32) {
    %c0_i32 = arith.constant 0 : i32
    %c0_i32_0 = arith.constant 0 : i32
    return %arg0, %c0_i32 : i32, i32
  }
}

</mosaic_0001>

<llo_original>
// kernel: tpu_custom_call.1
$region0: #{tpu_custom_call.1}
  #allocation0 [shape = 'u32[]', space=smem, size = 0x4, offset = 0x4, fixed_abs, tag = 'smem constant byte address 0x4 - core index']
  #allocation1 [shape = 'u32[144,128]{1,0:T(1,128)}', space=vmem, size = 0x12000, scoped, tag = 'internal scratch']
  #allocation2 [shape = 'f32[8,128]{1,0:T(8,128)}', space=vmem, size = 0x1000, scoped, tag = 'scratch operand']
  %s0 = inlined_call_operand.hbm [shape: f32[8,256], index: 0, kind: input, shape index: {}]
  %s1 = inlined_call_operand.hbm [shape: f32[8,256], index: 1, kind: input, shape index: {}]
  %s2 = inlined_call_operand.vmem [shape: f32[8,1], index: 2, kind: output, shape index: {}]
  %s3 = sld [smem:[#allocation0]]
  $region34: #{tpu_custom_call.1} parent=0
    _
  %s5 = ssub.s32 1, %s3
  %s6 = scalar_select 0, %s5, %s3
  $region1: #{tpu_custom_call.1} parent=0
    #allocation3 [shape = 'u8[8192]{0}', space=vmem, size = 0x2000, scoped, tag = 'input window, operand 0, single buffered']
    #allocation4 [shape = 's32[1]{0}', space=sflag, size = 0x4, scoped, tag = 'scoped memory for tpu_custom_call.1']
    #allocation5 [shape = 'u8[8192]{0}', space=vmem, size = 0x2000, scoped, tag = 'input window, operand 1, single buffered']
    #allocation6 [shape = 's32[1]{0}', space=sflag, size = 0x4, scoped, tag = 'scoped memory for tpu_custom_call.1']
    %7 = vsyncpa [#allocation4], 0
    %8 = vsyncpa [#allocation6], 0
    // Predicated region
    $region2: #{tpu_custom_call.1} parent=1 // pred_check
      _
    $region3: #{tpu_custom_call.1} parent=1 // pred_check_branch
      %10 = sbr.rel (0) target = $region5
    $region4: #{tpu_custom_call.1} parent=1 // pred_region
      %s12 = ssub.s32 256, 256
      %13 = vsyncadd [#allocation4], %s12
      %s15 = sshll.u32 [#allocation3], 4
      %s16 = int_to_ptr.vmem [resolvable:$true] %s15
      %18 = dma.hbm_to_vmem [thread:$0]  %s0, 256, %s16, [#allocation4]
    $region5: #{tpu_custom_call.1} parent=1 // pred_fallthru
      _
    // Predicated region
    $region6: #{tpu_custom_call.1} parent=1 // pred_check
      _
    $region7: #{tpu_custom_call.1} parent=1 // pred_check_branch
      %20 = sbr.rel (0) target = $region9
    $region8: #{tpu_custom_call.1} parent=1 // pred_region
      %s22 = ssub.s32 256, 256
      %23 = vsyncadd [#allocation6], %s22
      %s25 = sshll.u32 [#allocation5], 4
      %s26 = int_to_ptr.vmem [resolvable:$true] %s25
      %28 = dma.hbm_to_vmem [thread:$0]  %s1, 256, %s26, [#allocation6]
    $region9: #{tpu_custom_call.1} parent=1 // pred_fallthru
      _
    // Predicated region
    $region10: #{tpu_custom_call.1} parent=1 // pred_check
      _
    $region11: #{tpu_custom_call.1} parent=1 // pred_check_branch
      %30 = sbr.rel (0) target = $region13
    $region12: #{tpu_custom_call.1} parent=1 // pred_region
      %31 = dma.done [#allocation4], 256
    $region13: #{tpu_custom_call.1} parent=1 // pred_fallthru
      _
    // Predicated region
    $region14: #{tpu_custom_call.1} parent=1 // pred_check
      _
    $region15: #{tpu_custom_call.1} parent=1 // pred_check_branch
      %33 = sbr.rel (0) target = $region17
    $region16: #{tpu_custom_call.1} parent=1 // pred_region
      %34 = dma.done [#allocation6], 256
    $region17: #{tpu_custom_call.1} parent=1 // pred_fallthru
      _
    %p35 = scmp.eq.s32.totalorder 0, 0
    // Predicated region
    $region18: #{tpu_custom_call.1} parent=1 // pred_check
      %p36 = pneg %p35
    $region19: #{tpu_custom_call.1} parent=1 // pred_check_branch
      %38 = sbr.rel (%p36) target = $region21
    $region20: #{tpu_custom_call.1} parent=1 // pred_region
      %39 = vst [vmem:[#allocation2] sm:$0xff] 0.0
    $region21: #{tpu_custom_call.1} parent=1 // pred_fallthru
      _
    %v40 = vld [vmem:[#allocation3] sm:$0xff]
    %v41 = vld [vmem:[#allocation3 + $0x8] sm:$0xff]
    %v42 = vld [vmem:[#allocation5] sm:$0xff]
    %v43 = vld [vmem:[#allocation5 + $0x8] sm:$0xff]
    %v44 = vmul.f32 %v40, %v42
    %v45 = vmul.f32 %v41, %v43
    %v46 = vadd.f32 %v44, %v45
    %v47 = vld [vmem:[#allocation2] sm:$0xff]
    %v48 = vadd.f32 %v47, %v46
    %49 = vst [vmem:[#allocation2] sm:$0xff] %v48
    // Predicated region
    $region22: #{tpu_custom_call.1} parent=1 // pred_check
      %p50 = pneg %p35
    $region23: #{tpu_custom_call.1} parent=1 // pred_check_branch
      %52 = sbr.rel (%p50) target = $region25
    $region24: #{tpu_custom_call.1} parent=1 // pred_region
      %v53 = vld [vmem:[#allocation2] sm:$0xff]
      %54 = vadd.xlane.f32.xlu0 %v53
      %v55 = vpop.xlane.xlu0 %54
      %v56 = vmul.f32 %v55, 0.00390625
      %vm57 = vcmask 7168
      %58 = vst.msk [vmem:[%s2] sm:$0xff] %vm57, %v56
    $region25: #{tpu_custom_call.1} parent=1 // pred_fallthru
      _
    // Predicated region
    $region26: #{tpu_custom_call.1} parent=1 // pred_check
      _
    $region27: #{tpu_custom_call.1} parent=1 // pred_check_branch
      %60 = sbr.rel (0) target = $region29
    $region28: #{tpu_custom_call.1} parent=1 // pred_region
      _
    $region29: #{tpu_custom_call.1} parent=1 // pred_fallthru
      _
    // Predicated region
    $region30: #{tpu_custom_call.1} parent=1 // pred_check
      _
    $region31: #{tpu_custom_call.1} parent=1 // pred_check_branch
      %62 = sbr.rel (0) target = $region33
    $region32: #{tpu_custom_call.1} parent=1 // pred_region
      _
    $region33: #{tpu_custom_call.1} parent=1 // pred_fallthru
      _
    %63 = vsyncpa [#allocation4], 1
    %64 = vsyncpa [#allocation6], 1

</llo_original>
